<compile_context>
chip_gen: v7x
topology: tpu7x:2x2x1
jax: 0.10.0
libtpu: 0.0.40
codegen_flags: <defaults>
</compile_context>

<pallas_src>
import jax
import jax.numpy as jnp
from jax.experimental import pallas as pl
from jax.experimental.pallas import tpu as pltpu


def _round_up(x, m):
    return ((x + m - 1) // m) * m


# ---------------------------------------------------------------------------
# Kernel 1: per-etype linear transform  Wh = X @ W^T + b.
# Computed once per etype (hoisted out of the aggregation), emitted as bf16.
# ---------------------------------------------------------------------------
def _linear_kernel(x_ref, w_ref, b_ref, o_ref):
    acc = jnp.dot(x_ref[...], w_ref[...], preferred_element_type=jnp.float32)
    o_ref[...] = (acc + b_ref[...]).astype(o_ref.dtype)


def _etype_linear(x_pad, w_t_pad, b_pad, tile_rows):
    """x_pad: (n_rows, in_pad) bf16, w_t_pad: (in_pad, out_pad) bf16 (pre-transposed),
    b_pad: (1, out_pad) f32.  Returns (n_rows, out_pad) bf16."""
    n_rows, in_pad = x_pad.shape
    out_pad = w_t_pad.shape[1]
    flops = 2 * n_rows * in_pad * out_pad
    bytes_accessed = (x_pad.size * 2 + w_t_pad.size * 2 + b_pad.size * 4
                      + n_rows * out_pad * 2)
    return pl.pallas_call(
        _linear_kernel,
        out_shape=jax.ShapeDtypeStruct((n_rows, out_pad), jnp.bfloat16),
        grid=(n_rows // tile_rows,),
        in_specs=[
            pl.BlockSpec((tile_rows, in_pad), lambda i: (i, 0)),
            pl.BlockSpec((in_pad, out_pad), lambda i: (0, 0)),
            pl.BlockSpec((1, out_pad), lambda i: (0, 0)),
        ],
        out_specs=pl.BlockSpec((tile_rows, out_pad), lambda i: (i, 0)),
        compiler_params=pltpu.CompilerParams(
            dimension_semantics=("parallel",)),
        cost_estimate=pl.CostEstimate(flops=flops, transcendentals=0,
                                      bytes_accessed=bytes_accessed),
    )(x_pad, w_t_pad, b_pad)


# ---------------------------------------------------------------------------
# Kernel 2: per-dsttype aggregation  out[d] = sum_e sum_s A[e, d, s] @ Wh[e, s]
# Output tile is resident in VMEM across the whole (e, s) reduction.
# ---------------------------------------------------------------------------
def _hetero_agg_kernel(tiles_ref, a_ref, wh_ref, o_ref):
    e = pl.program_id(1)
    s = pl.program_id(2)

    @pl.when(jnp.logical_and(e == 0, s == 0))
    def _():
        o_ref[...] = jnp.zeros_like(o_ref)

    # Skip src tiles beyond this etype's valid range (index_map clamps them to the
    # last valid tile, so no new DMA is issued either).
    @pl.when(s < tiles_ref[e])
    def _():
        # A staged as int8 (0/1 indicators, exact); upcast to bf16 on the VPU right
        # before the MXU matmul.  f32 accumulation into the resident output.
        a = a_ref[0].astype(jnp.bfloat16)
        o_ref[...] += jnp.dot(a, wh_ref[0], preferred_element_type=jnp.float32)


def _hetero_aggregate(tiles, a_stack, wh_stack, tile_dst, tile_src):
    """tiles: (E,) int32 valid-src-tile count per etype
    a_stack: (E, n_dst_pad, n_src_pad) int8 dense adjacency per contributing etype
    wh_stack: (E, n_src_pad, out_pad) bf16 precomputed per-etype messages
    returns (n_dst_pad, out_pad) f32."""
    E, n_dst_pad, n_src_pad = a_stack.shape
    out_pad = wh_stack.shape[-1]
    grid = (n_dst_pad // tile_dst, E, n_src_pad // tile_src)

    # VMEM budget derived from actual tile sizes (buffered inputs + resident f32 output);
    # keeps headroom on v7x's 64 MiB physical VMEM, not needlessly conservative elsewhere.
    a_tile_b = tile_dst * tile_src                # int8
    wh_tile_b = tile_src * out_pad * 2            # bf16
    out_b = tile_dst * out_pad * 4                # f32
    need = 3 * (a_tile_b + wh_tile_b) + 2 * out_b
    vmem_limit = int(min(max(need + (4 << 20), 32 << 20), 56 << 20))

    dst_tiles = grid[0]
    flops = 2 * E * n_dst_pad * n_src_pad * out_pad
    bytes_accessed = (a_stack.size                         # A (int8), read once
                      + dst_tiles * wh_stack.size * 2      # Wh re-streamed per dst tile
                      + n_dst_pad * out_pad * 4)           # output write

    return pl.pallas_call(
        _hetero_agg_kernel,
        out_shape=jax.ShapeDtypeStruct((n_dst_pad, out_pad), jnp.float32),
        grid_spec=pltpu.PrefetchScalarGridSpec(
            num_scalar_prefetch=1,
            grid=grid,
            in_specs=[
                # A tile: (tile_dst, tile_src) per (d, e, s); s clamped to the last valid
                # src tile of this etype so all-zero padded tiles are never re-fetched.
                pl.BlockSpec(
                    (1, tile_dst, tile_src),
                    lambda d, e, s, tiles: (e, d, jnp.minimum(s, tiles[e] - 1))),
                # Wh tile: (tile_src, out_pad); constant across dst tiles.
                pl.BlockSpec(
                    (1, tile_src, out_pad),
                    lambda d, e, s, tiles: (e, jnp.minimum(s, tiles[e] - 1), 0)),
            ],
            # Output block index depends only on d -> resident across the (e, s) reduction.
            out_specs=pl.BlockSpec((tile_dst, out_pad),
                                   lambda d, e, s, tiles: (d, 0)),
        ),
        compiler_params=pltpu.CompilerParams(
            dimension_semantics=("parallel", "arbitrary", "arbitrary"),
            vmem_limit_bytes=vmem_limit,
        ),
        cost_estimate=pl.CostEstimate(flops=flops, transcendentals=0,
                                      bytes_accessed=bytes_accessed),
    )(tiles, a_stack, wh_stack)


# ---------------------------------------------------------------------------
# Wrapper: one-time graph staging + per-forward computation.
# ---------------------------------------------------------------------------
def stage_graph(canonical_etypes, adjacency, num_nodes,
                max_tile_dst=512, max_tile_src=1024):
    """One-time staging of the graph structure (pad + int8 cast of adjacency).
    Done outside the per-forward hot path."""
    staged = {}
    dsttypes = sorted({d for (_, _, d) in canonical_etypes})
    for dsttype in dsttypes:
        contribs = [(s, e) for (s, e, d) in canonical_etypes if d == dsttype]
        if not contribs:
            # Destination types with no incoming edge types are omitted (matches DGL).
            continue
        n_dst = num_nodes[dsttype]
        max_src = max(num_nodes[s] for s, _ in contribs)

        # tile_dst: 128-aligned and >= 2 tiles when n_dst allows (keeps both v7x
        # TensorCores busy on the "parallel" axis); otherwise a single 8-aligned tile.
        if n_dst >= 256:
            tile_dst = min(max_tile_dst, _round_up(-(-n_dst // 2), 128))
        else:
            tile_dst = _round_up(n_dst, 8)
        src_aligned = _round_up(max_src, 128)
        tile_src = src_aligned if src_aligned <= max_tile_src else max_tile_src
        n_dst_pad = _round_up(n_dst, tile_dst)
        n_src_pad = _round_up(max_src, tile_src)

        a_list, tiles_list = [], []
        for srctype, etype in contribs:
            A = adjacency[etype]                          # (n_dst, n_src)
            n_src = num_nodes[srctype]
            # Zero padding is load-bearing: padded Wh rows hold only the bias but are
            # multiplied by zero adjacency columns, so they contribute nothing.
            A = jnp.pad(A, ((0, n_dst_pad - n_dst), (0, n_src_pad - n_src)))
            a_list.append(A.astype(jnp.int8))             # 0/1 indicators: exact in int8
            tiles_list.append(-(-n_src // tile_src))      # valid src tiles for this etype

        staged[dsttype] = dict(
            contribs=contribs,
            n_dst=n_dst,
            tile_dst=tile_dst,
            tile_src=tile_src,
            n_src_pad=n_src_pad,
            a_stack=jnp.stack(a_list),
            tiles=jnp.asarray(tiles_list, jnp.int32),
        )
    return staged


def hetero_graph_conv(staged, h_dict, params, in_size, out_size):
    """Forward pass.  h_dict[ntype]: (num_nodes, in_size) f32.
    params[etype]: (W (out, in), b (out,)) torch nn.Linear convention.
    Returns {dsttype: (num_nodes, out_size) f32}."""
    in_pad = _round_up(in_size, 128)      # lane-dense contraction dim
    out_pad = _round_up(out_size, 128)    # lane-dense output dim (unmasked stores)

    out = {}
    for dsttype, st in staged.items():
        tile_src = st["tile_src"]
        n_src_pad = st["n_src_pad"]

        wh_list = []
        for srctype, etype in st["contribs"]:
            X = h_dict[srctype]
            n_src = X.shape[0]
            Xp = jnp.pad(X, ((0, n_src_pad - n_src), (0, in_pad - in_size)))
            W, b = params[etype]
            # Pre-transpose torch (out, in) -> (in, out) so the kernel needs no .T.
            Wt = jnp.pad(W.T, ((0, in_pad - in_size), (0, out_pad - out_size)))
            bp = jnp.pad(b, (0, out_pad - out_size)).reshape(1, out_pad)
            # Hoisted per-etype linear: computed once per etype, not once per dst tile.
            wh_list.append(_etype_linear(Xp.astype(jnp.bfloat16),
                                         Wt.astype(jnp.bfloat16),
                                         bp.astype(jnp.float32),
                                         tile_rows=tile_src))
        wh_stack = jnp.stack(wh_list)                     # (E, n_src_pad, out_pad) bf16

        res = _hetero_aggregate(st["tiles"], st["a_stack"], wh_stack,
                                st["tile_dst"], st["tile_src"])
        out[dsttype] = res[:st["n_dst"], :out_size]
    return out


def _reference(canonical_etypes, adjacency, h_dict, params):
    """Pure-JAX reference mirroring the kernel's numerics (bf16 Wh, f32 accumulation)."""
    bf = lambda x: x.astype(jnp.bfloat16).astype(jnp.float32)
    out = {}
    for srctype, etype, dsttype in canonical_etypes:
        W, b = params[etype]
        wh = bf(bf(h_dict[srctype]) @ bf(W).T + b)        # Wh stored bf16 by the kernel
        contrib = adjacency[etype] @ wh                   # 0/1 adjacency: exact
        out[dsttype] = out.get(dsttype, 0.0) + contrib
    return out


if __name__ == "__main__":
    key = jax.random.PRNGKey(0)

    # Small synthetic heterograph: two node types, three canonical edge types.
    in_size, out_size = 32, 32
    num_nodes = {"user": 8, "item": 16}
    canonical_etypes = [
        ("user", "follows", "user"),
        ("user", "clicks", "item"),
        ("item", "clicked-by", "user"),
    ]

    keys = jax.random.split(key, 16)

    # Node features (num_nodes, in_size), float32.
    h_dict = {
        "user": jax.random.normal(keys[0], (num_nodes["user"], in_size), jnp.float32),
        "item": jax.random.normal(keys[1], (num_nodes["item"], in_size), jnp.float32),
    }

    # Dense 0/1 adjacency per etype, shape (num_dst, num_src).
    adjacency = {}
    for i, (srctype, etype, dsttype) in enumerate(canonical_etypes):
        adjacency[etype] = jax.random.bernoulli(
            keys[2 + i], 0.3, (num_nodes[dsttype], num_nodes[srctype])
        ).astype(jnp.float32)

    # Deterministic per-etype Linear parameters (torch nn.Linear shapes).
    params = {}
    for i, (_, etype, _) in enumerate(canonical_etypes):
        W = 0.1 * jax.random.normal(keys[8 + i], (out_size, in_size), jnp.float32)
        b = 0.01 * jax.random.normal(keys[12 + i], (out_size,), jnp.float32)
        params[etype] = (W, b)

    # One-time graph staging (outside the hot path), then the forward pass.
    staged = stage_graph(canonical_etypes, adjacency, num_nodes)
    result = hetero_graph_conv(staged, h_dict, params, in_size, out_size)
    result = jax.tree_util.tree_map(jax.block_until_ready, result)

    ref = _reference(canonical_etypes, adjacency, h_dict, params)
    for ntype in result:
        assert result[ntype].shape == (num_nodes[ntype], out_size)
        assert jnp.allclose(result[ntype], ref[ntype], atol=1e-2, rtol=1e-2), ntype

    print("KERNEL_OK")
</pallas_src>

<mosaic_0001>
module attributes {stable_mosaic.version = 11 : i64} {
  func.func @_linear_kernel(%arg0: i32, %arg1: memref<128x128xbf16, #tpu.memory_space<vmem>>, %arg2: memref<128x128xbf16, #tpu.memory_space<vmem>>, %arg3: memref<1x128xf32, #tpu.memory_space<vmem>>, %arg4: memref<128x128xbf16, #tpu.memory_space<vmem>>) attributes {dimension_semantics = [#tpu.dimension_semantics<parallel>], iteration_bounds = array<i64: 1>, scalar_prefetch = 0 : i64, scratch_operands = 0 : i64, tpu.core_type = #tpu.core_type<tc>, window_params = [{transform_indices = @transform_0, window_bounds = array<i64: 128, 128>}, {pipeline_mode = #tpu.pipeline_mode<synchronous>, transform_indices = @transform_1, window_bounds = array<i64: 128, 128>}, {pipeline_mode = #tpu.pipeline_mode<synchronous>, transform_indices = @transform_2, window_bounds = array<i64: 1, 128>}, {transform_indices = @transform_3, window_bounds = array<i64: 128, 128>}]} {
    %c0 = arith.constant 0 : index
    %c0_0 = arith.constant 0 : index
    %0 = vector.load %arg1[%c0, %c0_0] : memref<128x128xbf16, #tpu.memory_space<vmem>>, vector<128x128xbf16>
    %c0_1 = arith.constant 0 : index
    %c0_2 = arith.constant 0 : index
    %1 = vector.load %arg2[%c0_1, %c0_2] : memref<128x128xbf16, #tpu.memory_space<vmem>>, vector<128x128xbf16>
    %cst = arith.constant dense<0.000000e+00> : vector<128x128xf32>
    %2 = tpu.matmul %0, %1, %cst {dimension_numbers = #tpu.dot_dimension_numbers<[1], [0], [0], [1], [0, 0, 1, 1], [], []>} : vector<128x128xbf16>, vector<128x128xbf16>, vector<128x128xf32> -> vector<128x128xf32>
    %c0_3 = arith.constant 0 : index
    %c0_4 = arith.constant 0 : index
    %3 = vector.load %arg3[%c0_3, %c0_4] : memref<1x128xf32, #tpu.memory_space<vmem>>, vector<1x128xf32>
    %4 = vector.broadcast %3 : vector<1x128xf32> to vector<128x128xf32>
    %5 = arith.addf %2, %4 : vector<128x128xf32>
    %6 = arith.truncf %5 : vector<128x128xf32> to vector<128x128xbf16>
    %c0_5 = arith.constant 0 : index
    %c0_6 = arith.constant 0 : index
    %7 = vector.load %arg4[%c0_5, %c0_6] : memref<128x128xbf16, #tpu.memory_space<vmem>>, vector<128x128xbf16>
    tpu.vector_store %arg4[%c0_5, %c0_6], %6 {strides = array<i32>} : memref<128x128xbf16, #tpu.memory_space<vmem>>, vector<128x128xbf16>,
    return
  }
  func.func @transform_0(%arg0: i32) -> (i32, i32) {
    %c0_i32 = arith.constant 0 : i32
    %c0_i32_0 = arith.constant 0 : i32
    return %arg0, %c0_i32 : i32, i32
  }
  func.func @transform_1(%arg0: i32) -> (i32, i32) {
    %c0_i32 = arith.constant 0 : i32
    %c0_i32_0 = arith.constant 0 : i32
    %c0_i32_1 = arith.constant 0 : i32
    return %c0_i32, %c0_i32_0 : i32, i32
  }
  func.func @transform_2(%arg0: i32) -> (i32, i32) {
    %c0_i32 = arith.constant 0 : i32
    %c0_i32_0 = arith.constant 0 : i32
    %c0_i32_1 = arith.constant 0 : i32
    return %c0_i32, %c0_i32_0 : i32, i32
  }
  func.func @transform_3(%arg0: i32) -> (i32, i32) {
    %c0_i32 = arith.constant 0 : i32
    %c0_i32_0 = arith.constant 0 : i32
    return %arg0, %c0_i32 : i32, i32
  }
}

</mosaic_0001>

<llo_original>
// kernel: tpu_custom_call.1
$region0: #{tpu_custom_call.1}
  #allocation0 [shape = 'u32[]', space=smem, size = 0x4, offset = 0x4, fixed_abs, tag = 'smem constant byte address 0x4 - core index']
  #allocation1 [shape = 'u32[144,128]{1,0:T(1,128)}', space=vmem, size = 0x12000, scoped, tag = 'internal scratch']
  %s0 = inlined_call_operand.hbm [shape: bf16[128,128], index: 0, kind: input, shape index: {}]
  %s1 = inlined_call_operand.hbm [shape: bf16[128,128], index: 1, kind: input, shape index: {}]
  %s2 = inlined_call_operand.vmem [shape: f32[1,128], index: 2, kind: input, shape index: {}]
  %s3 = inlined_call_operand.hbm [shape: bf16[128,128], index: 3, kind: output, shape index: {}]
  %s4 = sld [smem:[#allocation0]]
  $region30: #{tpu_custom_call.1} parent=0
    _
  %s6 = ssub.s32 1, %s4
  %s7 = scalar_select 0, %s6, %s4
  $region1: #{tpu_custom_call.1} parent=0
    #allocation2 [shape = 'u8[32768]{0}', space=vmem, size = 0x8000, scoped, tag = 'input window, operand 0, single buffered']
    #allocation3 [shape = 's32[1]{0}', space=sflag, size = 0x4, scoped, tag = 'scoped memory for tpu_custom_call.1']
    #allocation4 [shape = 's32[1]{0}', space=sflag, size = 0x4, scoped, tag = 'scoped memory for tpu_custom_call.1']
    #allocation5 [shape = 'u8[32768]{0}', space=vmem, size = 0x8000, scoped, tag = 'input window, operand 1, single buffered']
    #allocation6 [shape = 's32[1]{0}', space=sflag, size = 0x4, scoped, tag = 'scoped memory for tpu_custom_call.1']
    #allocation7 [shape = 'u8[32768]{0}', space=vmem, size = 0x8000, scoped, tag = 'output window, operand 0, single buffered']
    %8 = vsyncpa [#allocation3], 0
    %9 = vsyncpa [#allocation6], 0
    %10 = vsyncpa [#allocation4], 0
    // Predicated region
    $region2: #{tpu_custom_call.1} parent=1 // pred_check
      _
    $region3: #{tpu_custom_call.1} parent=1 // pred_check_branch
      %12 = sbr.rel (0) target = $region5
    $region4: #{tpu_custom_call.1} parent=1 // pred_region
      %s14 = ssub.s32 1024, 1024
      %15 = vsyncadd [#allocation3], %s14
      %s16 = sshll.u32 [#allocation2], 4
      %s17 = int_to_ptr.vmem [resolvable:$true] %s16
      %22 = dma.hbm_to_vmem [thread:$0]  %s0, 1024, %s17, [#allocation3], 64, 64, 4
    $region5: #{tpu_custom_call.1} parent=1 // pred_fallthru
      _
    // Predicated region
    $region6: #{tpu_custom_call.1} parent=1 // pred_check
      _
    $region7: #{tpu_custom_call.1} parent=1 // pred_check_branch
      %24 = sbr.rel (0) target = $region9
    $region8: #{tpu_custom_call.1} parent=1 // pred_region
      %s26 = ssub.s32 1024, 1024
      %27 = vsyncadd [#allocation6], %s26
      %s28 = sshll.u32 [#allocation5], 4
      %s29 = int_to_ptr.vmem [resolvable:$true] %s28
      %34 = dma.hbm_to_vmem [thread:$0]  %s1, 1024, %s29, [#allocation6], 64, 64, 4
    $region9: #{tpu_custom_call.1} parent=1 // pred_fallthru
      _
    // Predicated region
    $region10: #{tpu_custom_call.1} parent=1 // pred_check
      _
    $region11: #{tpu_custom_call.1} parent=1 // pred_check_branch
      %36 = sbr.rel (0) target = $region13
    $region12: #{tpu_custom_call.1} parent=1 // pred_region
      _
    $region13: #{tpu_custom_call.1} parent=1 // pred_fallthru
      _
    // Predicated region
    $region14: #{tpu_custom_call.1} parent=1 // pred_check
      _
    $region15: #{tpu_custom_call.1} parent=1 // pred_check_branch
      %38 = sbr.rel (0) target = $region17
    $region16: #{tpu_custom_call.1} parent=1 // pred_region
      %39 = dma.done [#allocation3], 1024
    $region17: #{tpu_custom_call.1} parent=1 // pred_fallthru
      _
    // Predicated region
    $region18: #{tpu_custom_call.1} parent=1 // pred_check
      _
    $region19: #{tpu_custom_call.1} parent=1 // pred_check_branch
      %41 = sbr.rel (0) target = $region21
    $region20: #{tpu_custom_call.1} parent=1 // pred_region
      %42 = dma.done [#allocation6], 1024
    $region21: #{tpu_custom_call.1} parent=1 // pred_fallthru
      _
    %v44 = vld [vmem:[#allocation2] sm:$0xf]
    %v45 = vld [vmem:[#allocation2 + $0x4] sm:$0xf]
    %v46 = vld [vmem:[#allocation2 + $0x8] sm:$0xf]
    %v47 = vld [vmem:[#allocation2 + $0xc] sm:$0xf]
    %v48 = vld [vmem:[#allocation2 + $0x10] sm:$0xf]
    %v49 = vld [vmem:[#allocation2 + $0x14] sm:$0xf]
    %v50 = vld [vmem:[#allocation2 + $0x18] sm:$0xf]
    %v51 = vld [vmem:[#allocation2 + $0x1c] sm:$0xf]
    %v52 = vld [vmem:[#allocation2 + $0x20] sm:$0xf]
    %v53 = vld [vmem:[#allocation2 + $0x24] sm:$0xf]
    %v54 = vld [vmem:[#allocation2 + $0x28] sm:$0xf]
    %v55 = vld [vmem:[#allocation2 + $0x2c] sm:$0xf]
    %v56 = vld [vmem:[#allocation2 + $0x30] sm:$0xf]
    %v57 = vld [vmem:[#allocation2 + $0x34] sm:$0xf]
    %v58 = vld [vmem:[#allocation2 + $0x38] sm:$0xf]
    %v59 = vld [vmem:[#allocation2 + $0x3c] sm:$0xf]
    %v60 = vld [vmem:[#allocation5] sm:$0xf]
    %v61 = vld [vmem:[#allocation5 + $0x4] sm:$0xf]
    %v62 = vld [vmem:[#allocation5 + $0x8] sm:$0xf]
    %v63 = vld [vmem:[#allocation5 + $0xc] sm:$0xf]
    %v64 = vld [vmem:[#allocation5 + $0x10] sm:$0xf]
    %v65 = vld [vmem:[#allocation5 + $0x14] sm:$0xf]
    %v66 = vld [vmem:[#allocation5 + $0x18] sm:$0xf]
    %v67 = vld [vmem:[#allocation5 + $0x1c] sm:$0xf]
    %v68 = vld [vmem:[#allocation5 + $0x20] sm:$0xf]
    %v69 = vld [vmem:[#allocation5 + $0x24] sm:$0xf]
    %v70 = vld [vmem:[#allocation5 + $0x28] sm:$0xf]
    %v71 = vld [vmem:[#allocation5 + $0x2c] sm:$0xf]
    %v72 = vld [vmem:[#allocation5 + $0x30] sm:$0xf]
    %v73 = vld [vmem:[#allocation5 + $0x34] sm:$0xf]
    %v74 = vld [vmem:[#allocation5 + $0x38] sm:$0xf]
    %v75 = vld [vmem:[#allocation5 + $0x3c] sm:$0xf]
    %v76 = vld [vmem:[%s2] sm:$0x1]
    %v78 = vlaneseq
    %v79 = vshrl.u32 %v78, 7
    %v80 = vsub.s32 0, %v79
    %v81 = vrot.slane %v76, %v80
    %v99 = vunpack.c.l.b16 %v44
    %v100 = vunpack.c.l.b16 %v45
    %v101 = vunpack.c.l.b16 %v46
    %v102 = vunpack.c.l.b16 %v47
    %v103 = vunpack.c.l.b16 %v48
    %v104 = vunpack.c.l.b16 %v49
    %v105 = vunpack.c.l.b16 %v50
    %v106 = vunpack.c.l.b16 %v51
    %v107 = vunpack.c.l.b16 %v52
    %v108 = vunpack.c.l.b16 %v53
    %v109 = vunpack.c.l.b16 %v54
    %v110 = vunpack.c.l.b16 %v55
    %v111 = vunpack.c.l.b16 %v56
    %v112 = vunpack.c.l.b16 %v57
    %v113 = vunpack.c.l.b16 %v58
    %v114 = vunpack.c.l.b16 %v59
    %v115 = vpack.c.b16 %v100, %v99
    %v116 = vpack.c.b16 %v102, %v101
    %v117 = vpack.c.b16 %v104, %v103
    %v118 = vpack.c.b16 %v106, %v105
    %v119 = vpack.c.b16 %v108, %v107
    %v120 = vpack.c.b16 %v110, %v109
    %v121 = vpack.c.b16 %v112, %v111
    %v122 = vpack.c.b16 %v114, %v113
    %v147 = vunpack.c.l.b16 %v60
    %v148 = vunpack.c.l.b16 %v61
    %v149 = vunpack.c.l.b16 %v62
    %v150 = vunpack.c.l.b16 %v63
    %v151 = vunpack.c.l.b16 %v64
    %v152 = vunpack.c.l.b16 %v65
    %v153 = vunpack.c.l.b16 %v66
    %v154 = vunpack.c.l.b16 %v67
    %v155 = vunpack.c.l.b16 %v68
    %v156 = vunpack.c.l.b16 %v69
    %v157 = vunpack.c.l.b16 %v70
    %v158 = vunpack.c.l.b16 %v71
    %v159 = vunpack.c.l.b16 %v72
    %v160 = vunpack.c.l.b16 %v73
    %v161 = vunpack.c.l.b16 %v74
    %v162 = vunpack.c.l.b16 %v75
    %v163 = vpack.c.b16 %v148, %v147
    %v164 = vpack.c.b16 %v150, %v149
    %v165 = vpack.c.b16 %v152, %v151
    %v166 = vpack.c.b16 %v154, %v153
    %v167 = vpack.c.b16 %v156, %v155
    %v168 = vpack.c.b16 %v158, %v157
    %v169 = vpack.c.b16 %v160, %v159
    %v170 = vpack.c.b16 %v162, %v161
    %179 = vmatprep.subr.bf16.mxu0 0
    %180 = vmatpush1.bf16.msra.mxu0 %v163
    %181 = vmatprep.subr.bf16.mxu0 0
    %182 = vmatpush1.bf16.msra.mxu0 %v164
    %183 = vmatprep.subr.bf16.mxu0 0
    %184 = vmatpush1.bf16.msra.mxu0 %v165
    %185 = vmatprep.subr.bf16.mxu0 0
    %186 = vmatpush1.bf16.msra.mxu0 %v166
    %187 = vmatprep.subr.bf16.mxu0 0
    %188 = vmatpush1.bf16.msra.mxu0 %v167
    %189 = vmatprep.subr.bf16.mxu0 0
    %190 = vmatpush1.bf16.msra.mxu0 %v168
    %191 = vmatprep.subr.bf16.mxu0 0
    %192 = vmatpush1.bf16.msra.mxu0 %v169
    %193 = vmatprep.subr.bf16.mxu0 0
    %194 = vmatpush1.bf16.msra.mxu0 %v170
    %195 = vmatprep.subr.bf16.mxu0 0
    %196 = vmatpush1.bf16.msra.mxu0 0
    %197 = vmatprep.subr.bf16.mxu0 0
    %198 = vmatpush1.bf16.msra.mxu0 0
    %199 = vmatprep.subr.bf16.mxu0 0
    %200 = vmatpush1.bf16.msra.mxu0 0
    %201 = vmatprep.subr.bf16.mxu0 0
    %202 = vmatpush1.bf16.msra.mxu0 0
    %203 = vmatprep.subr.bf16.mxu0 0
    %204 = vmatpush1.bf16.msra.mxu0 0
    %205 = vmatprep.subr.bf16.mxu0 0
    %206 = vmatpush1.bf16.msra.mxu0 0
    %207 = vmatprep.subr.bf16.mxu0 0
    %208 = vmatpush1.bf16.msra.mxu0 0
    %209 = vmatprep.subr.bf16.mxu0 0
    %210 = vmatpush1.bf16.msra.mxu0 0
    %211 = vmatprep.mubr.bf16.mxu0 0
    %212 = vmatmul.mubr.bf16.gmra.mrb[0].mxu0 %v115
    %v213 = vpop.f32.mrb[0].mxu0
    %v214 = vadd.f32 %v81, %v213
    %v215 = vpop.f32.mrb[0].mxu0
    %v216 = vpop.f32.mrb[0].mxu0
    %v217 = vadd.f32 %v81, %v216
    %v218 = vpop.f32.mrb[0].mxu0
    %219 = vmatprep.mubr.bf16.mxu0 0
    %220 = vmatmul.mubr.bf16.gmra.mrb[0].mxu0 %v116
    %v221 = vpop.f32.mrb[0].mxu0
    %v222 = vadd.f32 %v81, %v221
    %v223 = vpop.f32.mrb[0].mxu0
    %v224 = vpop.f32.mrb[0].mxu0
    %v225 = vadd.f32 %v81, %v224
    %v226 = vpop.f32.mrb[0].mxu0
    %227 = vmatprep.mubr.bf16.mxu0 0
    %228 = vmatmul.mubr.bf16.gmra.mrb[0].mxu0 %v117
    %v229 = vpop.f32.mrb[0].mxu0
    %v230 = vadd.f32 %v81, %v229
    %v231 = vpop.f32.mrb[0].mxu0
    %v232 = vpop.f32.mrb[0].mxu0
    %v233 = vadd.f32 %v81, %v232
    %v234 = vpop.f32.mrb[0].mxu0
    %235 = vmatprep.mubr.bf16.mxu0 0
    %236 = vmatmul.mubr.bf16.gmra.mrb[0].mxu0 %v118
    %v237 = vpop.f32.mrb[0].mxu0
    %v238 = vadd.f32 %v81, %v237
    %v239 = vpop.f32.mrb[0].mxu0
    %v240 = vpop.f32.mrb[0].mxu0
    %v241 = vadd.f32 %v81, %v240
    %v242 = vpop.f32.mrb[0].mxu0
    %243 = vmatprep.mubr.bf16.mxu0 0
    %244 = vmatmul.mubr.bf16.gmra.mrb[0].mxu0 %v119
    %v245 = vpop.f32.mrb[0].mxu0
    %v246 = vadd.f32 %v81, %v245
    %v247 = vpop.f32.mrb[0].mxu0
    %v248 = vpop.f32.mrb[0].mxu0
    %v249 = vadd.f32 %v81, %v248
    %v250 = vpop.f32.mrb[0].mxu0
    %251 = vmatprep.mubr.bf16.mxu0 0
    %252 = vmatmul.mubr.bf16.gmra.mrb[0].mxu0 %v120
    %v253 = vpop.f32.mrb[0].mxu0
    %v254 = vadd.f32 %v81, %v253
    %v255 = vpop.f32.mrb[0].mxu0
    %v256 = vpop.f32.mrb[0].mxu0
    %v257 = vadd.f32 %v81, %v256
    %v258 = vpop.f32.mrb[0].mxu0
    %259 = vmatprep.mubr.bf16.mxu0 0
    %260 = vmatmul.mubr.bf16.gmra.mrb[0].mxu0 %v121
    %v261 = vpop.f32.mrb[0].mxu0
    %v262 = vadd.f32 %v81, %v261
    %v263 = vpop.f32.mrb[0].mxu0
    %v264 = vpop.f32.mrb[0].mxu0
    %v265 = vadd.f32 %v81, %v264
    %v266 = vpop.f32.mrb[0].mxu0
    %267 = vmatprep.mubr.bf16.mxu0 0
    %268 = vmatmul.mubr.bf16.gmra.mrb[0].mxu0 %v122
    %v269 = vpop.f32.mrb[0].mxu0
    %v270 = vadd.f32 %v81, %v269
    %v271 = vpop.f32.mrb[0].mxu0
    %v272 = vpop.f32.mrb[0].mxu0
    %v273 = vadd.f32 %v81, %v272
    %v274 = vpop.f32.mrb[0].mxu0
    %275 = vdwg.mxu0
    %v276 = vpack.c.bf16 %v217, %v214
    %v277 = vpack.c.bf16 %v225, %v222
    %v278 = vpack.c.bf16 %v233, %v230
    %v279 = vpack.c.bf16 %v241, %v238
    %v280 = vpack.c.bf16 %v249, %v246
    %v281 = vpack.c.bf16 %v257, %v254
    %v282 = vpack.c.bf16 %v265, %v262
    %v283 = vpack.c.bf16 %v273, %v270
    %v292 = vunpack.c.l.b16 %v276
    %v293 = vunpack.c.h.b16 %v276
    %v294 = vunpack.c.l.b16 %v277
    %v295 = vunpack.c.h.b16 %v277
    %v296 = vunpack.c.l.b16 %v278
    %v297 = vunpack.c.h.b16 %v278
    %v298 = vunpack.c.l.b16 %v279
    %v299 = vunpack.c.h.b16 %v279
    %v300 = vunpack.c.l.b16 %v280
    %v301 = vunpack.c.h.b16 %v280
    %v302 = vunpack.c.l.b16 %v281
    %v303 = vunpack.c.h.b16 %v281
    %v304 = vunpack.c.l.b16 %v282
    %v305 = vunpack.c.h.b16 %v282
    %v306 = vunpack.c.l.b16 %v283
    %v307 = vunpack.c.h.b16 %v283
    %v308 = vpack.c.b16 %v292, %v292
    %v309 = vpack.c.b16 %v293, %v293
    %v310 = vpack.c.b16 %v294, %v294
    %v311 = vpack.c.b16 %v295, %v295
    %v312 = vpack.c.b16 %v296, %v296
    %v313 = vpack.c.b16 %v297, %v297
    %v314 = vpack.c.b16 %v298, %v298
    %v315 = vpack.c.b16 %v299, %v299
    %v316 = vpack.c.b16 %v300, %v300
    %v317 = vpack.c.b16 %v301, %v301
    %v318 = vpack.c.b16 %v302, %v302
    %v319 = vpack.c.b16 %v303, %v303
    %v320 = vpack.c.b16 %v304, %v304
    %v321 = vpack.c.b16 %v305, %v305
    %v322 = vpack.c.b16 %v306, %v306
    %v323 = vpack.c.b16 %v307, %v307
    %340 = vst [vmem:[#allocation7] sm:$0xf] %v308
    %341 = vst [vmem:[#allocation7 + $0x4] sm:$0xf] %v309
    %342 = vst [vmem:[#allocation7 + $0x8] sm:$0xf] %v310
    %343 = vst [vmem:[#allocation7 + $0xc] sm:$0xf] %v311
    %344 = vst [vmem:[#allocation7 + $0x10] sm:$0xf] %v312
    %345 = vst [vmem:[#allocation7 + $0x14] sm:$0xf] %v313
    %346 = vst [vmem:[#allocation7 + $0x18] sm:$0xf] %v314
    %347 = vst [vmem:[#allocation7 + $0x1c] sm:$0xf] %v315
    %348 = vst [vmem:[#allocation7 + $0x20] sm:$0xf] %v316
    %349 = vst [vmem:[#allocation7 + $0x24] sm:$0xf] %v317
    %350 = vst [vmem:[#allocation7 + $0x28] sm:$0xf] %v318
    %351 = vst [vmem:[#allocation7 + $0x2c] sm:$0xf] %v319
    %352 = vst [vmem:[#allocation7 + $0x30] sm:$0xf] %v320
    %353 = vst [vmem:[#allocation7 + $0x34] sm:$0xf] %v321
    %354 = vst [vmem:[#allocation7 + $0x38] sm:$0xf] %v322
    %355 = vst [vmem:[#allocation7 + $0x3c] sm:$0xf] %v323
    // Predicated region
    $region22: #{tpu_custom_call.1} parent=1 // pred_check
      _
    $region23: #{tpu_custom_call.1} parent=1 // pred_check_branch
      %357 = sbr.rel (0) target = $region25
    $region24: #{tpu_custom_call.1} parent=1 // pred_region
      %s359 = ssub.s32 1024, 1024
      %360 = vsyncadd [#allocation4], %s359
      %s361 = sshll.u32 [#allocation7], 4
      %s362 = int_to_ptr.vmem [resolvable:$true] %s361
      %367 = dma.vmem_to_hbm [thread:$0]  %s362, 1024, %s3, [#allocation4], 64, 64, 4
    $region25: #{tpu_custom_call.1} parent=1 // pred_fallthru
      _
    // Predicated region
    $region26: #{tpu_custom_call.1} parent=1 // pred_check
      _
    $region27: #{tpu_custom_call.1} parent=1 // pred_check_branch
      %369 = sbr.rel (0) target = $region29
    $region28: #{tpu_custom_call.1} parent=1 // pred_region
      %370 = dma.done [#allocation4], 1024
    $region29: #{tpu_custom_call.1} parent=1 // pred_fallthru
      _
    %371 = vsyncpa [#allocation3], 1
    %372 = vsyncpa [#allocation6], 1
    %373 = vsyncpa [#allocation4], 1

</llo_original>
